<compile_context>
chip_gen: v7x
topology: tpu7x:2x2x1
jax: 0.10.0
libtpu: 0.0.40
codegen_flags: <defaults>
</compile_context>

<pallas_src>
import functools

import jax
import jax.numpy as jnp
from jax.experimental import pallas as pl
from jax.experimental.pallas import tpu as pltpu


def _round_up(x, m):
    return (x + m - 1) // m * m


def _pad2d(a, rows, cols):
    r, c = a.shape
    if r == rows and c == cols:
        return a
    return jnp.pad(a, ((0, rows - r), (0, cols - c)))


# ---------------------------------------------------------------------------
# Pallas kernels: matmul + bias + activation (the conv hot path)
# ---------------------------------------------------------------------------
def _apply_act(y, act, slope):
    if act == "leaky_relu":
        return jnp.where(y >= 0, y, slope * y)
    if act == "tanh":
        return jnp.tanh(y)
    return y


def _mm_bias_act_kernel(x_ref, w_ref, b_ref, o_ref, *, act, slope):
    # Single reduction step: matmul + bias + activation fused, no accumulator.
    y = jnp.dot(x_ref[...], w_ref[...], preferred_element_type=jnp.float32)
    no = o_ref.shape[-1]
    if no != y.shape[-1]:            # narrow-N tail: weight is lane-padded to 128
        y = y[:, :no]
    o_ref[...] = _apply_act(y + b_ref[...], act, slope).astype(o_ref.dtype)


def _mm_bias_act_acc_kernel(x_ref, w_ref, b_ref, o_ref, acc_ref, *, act, slope):
    # Fallback for K too large for a single block: accumulate over the k axis.
    k = pl.program_id(2)

    @pl.when(k == 0)
    def _():
        acc_ref[...] = jnp.zeros_like(acc_ref)

    acc_ref[...] += jnp.dot(x_ref[...], w_ref[...],
                            preferred_element_type=jnp.float32)

    @pl.when(k == pl.num_programs(2) - 1)
    def _():
        y = acc_ref[...]
        no = o_ref.shape[-1]
        if no != y.shape[-1]:
            y = y[:, :no]
        o_ref[...] = _apply_act(y + b_ref[...], act, slope).astype(o_ref.dtype)


_VMEM_LIMIT = 32 * 1024 * 1024   # safe on v5e/v6e (128 MiB) and v7x (64 MiB)


def _pick_tm(M, Kw):
    """Row-tile: full (8-aligned) for small M, else big tiles capped ~2 MiB."""
    if M <= 1024:
        return _round_up(M, 8)
    budget_rows = (2 * 1024 * 1024) // (Kw * 4)
    tm = max(512, min(4096, budget_rows, _round_up(M, 8)))
    return max(8, (tm // 8) * 8)


def matmul_bias_act(x, wm, b2, act, slope=0.2):
    """act(x @ wm[:, :N] + b2) with N = b2.shape[1].

    x  : (M, K)   f32 patch matrix (K <= wm.shape[0]).
    wm : (Kw, Nw) packed weight, Kw = round_up(K, 8), Nw = round_up(N, 128).
    b2 : (1, N)   bias (true output width).
    """
    M, K = x.shape
    Kw, Nw = wm.shape
    N = b2.shape[1]
    assert Kw >= K and Kw % 8 == 0
    assert Nw == _round_up(N, 128)

    tm = _pick_tm(M, Kw)
    Mp = _round_up(M, tm)

    if N % 128 != 0:
        tn, n_j, out_w = Nw, 1, N     # lane-padded weight block, true-width output
    else:
        tn = 128 if Kw > 4608 else min(256, N)
        n_j, out_w = N // tn, tn

    # Keep (x tile + w tile), double buffered, comfortably inside VMEM.
    single_k = Kw * (tm + tn) * 4 * 2 <= 16 * 1024 * 1024

    if single_k:
        xp = _pad2d(x, Mp, Kw)
        out = pl.pallas_call(
            functools.partial(_mm_bias_act_kernel, act=act, slope=slope),
            out_shape=jax.ShapeDtypeStruct((Mp, N), jnp.float32),
            grid_spec=pltpu.PrefetchScalarGridSpec(
                num_scalar_prefetch=0,
                grid=(Mp // tm, n_j),
                in_specs=[
                    pl.BlockSpec((tm, Kw), lambda i, j: (i, 0)),
                    pl.BlockSpec((Kw, tn), lambda i, j: (0, j)),
                    pl.BlockSpec((1, out_w), lambda i, j: (0, j)),
                ],
                out_specs=pl.BlockSpec((tm, out_w), lambda i, j: (i, j)),
            ),
            compiler_params=pltpu.CompilerParams(
                dimension_semantics=("parallel", "parallel"),
                vmem_limit_bytes=_VMEM_LIMIT),
        )(xp, wm, b2)
    else:
        tk = 1024
        Kp = _round_up(Kw, tk)
        xp = _pad2d(x, Mp, Kp)
        wp = _pad2d(wm, Kp, Nw)
        out = pl.pallas_call(
            functools.partial(_mm_bias_act_acc_kernel, act=act, slope=slope),
            out_shape=jax.ShapeDtypeStruct((Mp, N), jnp.float32),
            grid_spec=pltpu.PrefetchScalarGridSpec(
                num_scalar_prefetch=0,
                grid=(Mp // tm, n_j, Kp // tk),
                in_specs=[
                    pl.BlockSpec((tm, tk), lambda i, j, k: (i, k)),
                    pl.BlockSpec((tk, tn), lambda i, j, k: (k, j)),
                    pl.BlockSpec((1, out_w), lambda i, j, k: (0, j)),
                ],
                out_specs=pl.BlockSpec((tm, out_w), lambda i, j, k: (i, j)),
                scratch_shapes=[pltpu.VMEM((tm, tn), jnp.float32)],
            ),
            compiler_params=pltpu.CompilerParams(
                dimension_semantics=("parallel", "parallel", "arbitrary"),
                vmem_limit_bytes=_VMEM_LIMIT),
        )(xp, wp, b2)

    if Mp != M:
        out = out[:M]
    return out


# ---------------------------------------------------------------------------
# Conv2d via im2col + fused Pallas matmul (encoder)
# ---------------------------------------------------------------------------
def conv2d_packed(x, wm, b2, *, ksize, stride, padding, act):
    """x: NHWC f32.  wm/b2: packed weight/bias (see _pack_conv_w)."""
    N, H, W, Cin = x.shape
    Cout = b2.shape[1]
    KH = KW = ksize
    if padding > 0:
        x = jnp.pad(x, ((0, 0), (padding, padding), (padding, padding), (0, 0)))
    OH = (H + 2 * padding - KH) // stride + 1
    OW = (W + 2 * padding - KW) // stride + 1
    patches = []
    for kh in range(KH):
        for kw in range(KW):
            patches.append(
                x[:, kh:kh + stride * (OH - 1) + 1:stride,
                     kw:kw + stride * (OW - 1) + 1:stride, :])
    pm = jnp.concatenate(patches, axis=-1).reshape(N * OH * OW, KH * KW * Cin)
    y = matmul_bias_act(pm, wm, b2, act)
    return y.reshape(N, OH, OW, Cout)


# ---------------------------------------------------------------------------
# ConvTranspose2d (stride 2) via per-output-parity (sub-pixel) decomposition
# ---------------------------------------------------------------------------
def _subpixel_taps(k, p):
    """For stride-2: per output parity a in {0,1}, list of (kernel tap t,
    input offset d) with  out[2m+a] += x[m+d] * W[t]."""
    taps = {}
    for a in (0, 1):
        lst = []
        for t in range(k):
            if (a + p - t) % 2 == 0:
                lst.append((t, (a + p - t) // 2))
        taps[a] = lst
    return taps


def _subpixel_noff(k, p):
    taps = _subpixel_taps(k, p)
    offs = sorted({d for a in (0, 1) for _, d in taps[a]})
    assert all(d in (0, 1) for d in offs), "sub-pixel path expects offsets {0,1}"
    return len(offs)


def _pack_convT_subpixel(w, k, stride, p, op):
    """Pack ConvTranspose2d weight (Cin, Cout, k, k) into a (n_off^2*Cin,
    4*Cout) matrix.  Column blocks are ordered by output parity (a, b)
    row-major; row blocks by input patch offset (dh, dw) row-major."""
    assert stride == 2 and k + op == 2 * p + 2, "requires out = 2 * in"
    cin, cout = int(w.shape[0]), int(w.shape[1])
    taps = _subpixel_taps(k, p)
    offs = sorted({d for a in (0, 1) for _, d in taps[a]})
    assert all(d in (0, 1) for d in offs)
    n_off = len(offs)
    oidx = {d: i for i, d in enumerate(offs)}
    Kd = n_off * n_off * cin
    wm = jnp.zeros((Kd, 4 * cout), jnp.float32)
    for a in (0, 1):
        for b in (0, 1):
            col = (a * 2 + b) * cout
            for th, dh in taps[a]:
                for tw, dw in taps[b]:
                    row = (oidx[dh] * n_off + oidx[dw]) * cin
                    wm = wm.at[row:row + cin, col:col + cout].add(w[:, :, th, tw])
    return _pad2d(wm, _round_up(Kd, 8), _round_up(4 * cout, 128))


def conv_transpose2d_subpixel(x, wm, b4, *, n_off, act):
    """x: NHWC.  wm: packed sub-pixel weight.  b4: (1, 4*Cout) tiled bias.
    Exact ConvTranspose2d(stride=2) -> output (N, 2H, 2W, Cout)."""
    N, H, W, Cin = x.shape
    Cout = b4.shape[1] // 4
    if n_off == 1:
        pm = x.reshape(N * H * W, Cin)
    else:
        xp = jnp.pad(x, ((0, 0), (0, 1), (0, 1), (0, 0)))
        blocks = [xp[:, dh:dh + H, dw:dw + W, :]
                  for dh in range(n_off) for dw in range(n_off)]
        pm = jnp.concatenate(blocks, axis=-1).reshape(
            N * H * W, n_off * n_off * Cin)
    y = matmul_bias_act(pm, wm, b4, act)                 # (M, 4*Cout)
    y = y.reshape(N, H, W, 2, 2, Cout)
    y = jnp.transpose(y, (0, 1, 3, 2, 4, 5))             # interleave parities
    return y.reshape(N, 2 * H, 2 * W, Cout)


# ---------------------------------------------------------------------------
# Model: deterministic parameter init + one-time weight packing + forward
# ---------------------------------------------------------------------------
ENC_LAYERS = [  # (cin, cout, k, stride, padding)
    (1, 16, 3, 2, 1), (16, 32, 3, 2, 1), (32, 64, 3, 2, 1), (64, 128, 3, 2, 1),
    (128, 256, 3, 2, 1), (256, 512, 3, 2, 1), (512, 1024, 3, 2, 1),
    (1024, 2048, 2, 1, 0),
]
DEC_LAYERS = [  # (cin, cout, k, stride, padding, output_padding)
    (2048, 1024, 2, 2, 0, 0),
    (1024, 512, 3, 2, 1, 1), (512, 256, 3, 2, 1, 1), (256, 128, 3, 2, 1, 1),
    (128, 64, 3, 2, 1, 1), (64, 32, 3, 2, 1, 1), (32, 16, 3, 2, 1, 1),
    (16, 1, 3, 2, 1, 1),
]


def _init_conv(key, cout, cin, k):
    fan_in = cin * k * k
    bound = 1.0 / (fan_in ** 0.5)
    kw_, kb = jax.random.split(key)
    w = jax.random.uniform(kw_, (cout, cin, k, k), jnp.float32, -bound, bound)
    b = jax.random.uniform(kb, (cout,), jnp.float32, -bound, bound)
    return w, b


def _init_convT(key, cin, cout, k):
    fan_in = cout * k * k   # PyTorch fan_in for ConvTranspose2d weights
    bound = 1.0 / (fan_in ** 0.5)
    kw_, kb = jax.random.split(key)
    w = jax.random.uniform(kw_, (cin, cout, k, k), jnp.float32, -bound, bound)
    b = jax.random.uniform(kb, (cout,), jnp.float32, -bound, bound)
    return w, b


def _pack_conv_w(w):
    # (Cout, Cin, KH, KW) -> (round_up(KH*KW*Cin, 8), round_up(Cout, 128))
    cout, cin, kh, kw = w.shape
    wm = jnp.transpose(w, (2, 3, 1, 0)).reshape(kh * kw * cin, cout)
    return _pad2d(wm, _round_up(kh * kw * cin, 8), _round_up(cout, 128))


def init_packed_params(key):
    keys = jax.random.split(key, len(ENC_LAYERS) + len(DEC_LAYERS))
    enc, dec = [], []
    for kk, (cin, cout, ks, _, _) in zip(keys[:len(ENC_LAYERS)], ENC_LAYERS):
        w, b = _init_conv(kk, cout, cin, ks)
        enc.append((_pack_conv_w(w), b.reshape(1, cout)))
    for kk, (cin, cout, ks, s, p, op) in zip(keys[len(ENC_LAYERS):], DEC_LAYERS):
        w, b = _init_convT(kk, cin, cout, ks)
        wm = _pack_convT_subpixel(w, ks, s, p, op)
        b4 = jnp.tile(b, 4).reshape(1, 4 * cout)
        dec.append((wm, b4))
    return {"enc": enc, "dec": dec}


def autoencoder_forward(params, x_nchw):
    x = jnp.transpose(x_nchw, (0, 2, 3, 1))  # NCHW -> NHWC
    # encoder: Conv2d + LeakyReLU(0.2) for every layer
    for (wm, b2), (_, _, ks, s, p) in zip(params["enc"], ENC_LAYERS):
        x = conv2d_packed(x, wm, b2, ksize=ks, stride=s, padding=p,
                          act="leaky_relu")
    # decoder: ConvTranspose2d + LeakyReLU(0.2), last layer Tanh
    n_dec = len(params["dec"])
    for i, ((wm, b4), (_, _, ks, s, p, op)) in enumerate(
            zip(params["dec"], DEC_LAYERS)):
        act = "tanh" if i == n_dec - 1 else "leaky_relu"
        x = conv_transpose2d_subpixel(x, wm, b4, n_off=_subpixel_noff(ks, p),
                                      act=act)
    return jnp.transpose(x, (0, 3, 1, 2))  # NHWC -> NCHW


# ---------------------------------------------------------------------------
# Reference for the sub-pixel ConvTranspose path (correctness guard)
# ---------------------------------------------------------------------------
def _convT_reference(x_nhwc, w, b, *, stride, padding, output_padding):
    k = w.shape[2]
    rhs = jnp.transpose(w[:, :, ::-1, ::-1], (2, 3, 0, 1))   # HWIO, flipped
    lo = k - 1 - padding
    hi = k - 1 - padding + output_padding
    y = jax.lax.conv_general_dilated(
        x_nhwc, rhs, window_strides=(1, 1),
        padding=((lo, hi), (lo, hi)),
        lhs_dilation=(stride, stride),
        dimension_numbers=("NHWC", "HWIO", "NHWC"),
        precision=jax.lax.Precision.HIGHEST)
    return y + b.reshape(1, 1, 1, -1)


def _check_subpixel(key, cin, cout, k, s, p, op, h, w_sp):
    kx, kw_ = jax.random.split(key)
    wt, bt = _init_convT(kw_, cin, cout, k)
    x = jax.random.normal(kx, (1, h, w_sp, cin), jnp.float32)
    wm = _pack_convT_subpixel(wt, k, s, p, op)
    b4 = jnp.tile(bt, 4).reshape(1, 4 * cout)
    got = conv_transpose2d_subpixel(x, wm, b4, n_off=_subpixel_noff(k, p),
                                    act="linear")
    want = _convT_reference(x, wt, bt, stride=s, padding=p, output_padding=op)
    assert got.shape == want.shape, (got.shape, want.shape)
    assert bool(jnp.allclose(got, want, rtol=1e-3, atol=1e-3))


if __name__ == "__main__":
    key = jax.random.PRNGKey(0)
    pkey, xkey, ck1, ck2 = jax.random.split(key, 4)

    # correctness guard for the sub-pixel ConvTranspose decomposition
    _check_subpixel(ck1, cin=8, cout=4, k=3, s=2, p=1, op=1, h=5, w_sp=7)
    _check_subpixel(ck2, cin=16, cout=8, k=2, s=2, p=0, op=0, h=3, w_sp=4)

    params = init_packed_params(pkey)
    # 129 is the smallest spatial size for which the encoder's final 2x2 conv
    # sees a valid (>=2x2) input; the decoder then reconstructs to 256x256,
    # exactly as the PyTorch module would.
    x = jax.random.normal(xkey, (1, 1, 129, 129), jnp.float32)
    fwd = jax.jit(autoencoder_forward)
    y = jax.block_until_ready(fwd(params, x))
    assert y.shape == (1, 1, 256, 256), y.shape
    assert bool(jnp.all(jnp.isfinite(y)))
    print("KERNEL_OK")
</pallas_src>

<mosaic_0001>
module attributes {stable_mosaic.version = 11 : i64} {
  func.func @_mm_bias_act_kernel(%arg0: i32, %arg1: i32, %arg2: memref<40x32xf32, #tpu.memory_space<vmem>>, %arg3: memref<32x128xf32, #tpu.memory_space<vmem>>, %arg4: memref<1x16xf32, #tpu.memory_space<vmem>>, %arg5: memref<40x16xf32, #tpu.memory_space<vmem>>) attributes {dimension_semantics = [#tpu.dimension_semantics<parallel>, #tpu.dimension_semantics<parallel>], iteration_bounds = array<i64: 1, 1>, scalar_prefetch = 0 : i64, scratch_operands = 0 : i64, tpu.core_type = #tpu.core_type<tc>, window_params = [{transform_indices = @transform_0, window_bounds = array<i64: 40, 32>}, {transform_indices = @transform_1, window_bounds = array<i64: 32, 128>}, {transform_indices = @transform_2, window_bounds = array<i64: 1, 16>}, {transform_indices = @transform_3, window_bounds = array<i64: 40, 16>}]} {
    %c0 = arith.constant 0 : index
    %c0_0 = arith.constant 0 : index
    %0 = vector.load %arg2[%c0, %c0_0] : memref<40x32xf32, #tpu.memory_space<vmem>>, vector<40x32xf32>
    %c0_1 = arith.constant 0 : index
    %c0_2 = arith.constant 0 : index
    %1 = vector.load %arg3[%c0_1, %c0_2] : memref<32x128xf32, #tpu.memory_space<vmem>>, vector<32x128xf32>
    %cst = arith.constant dense<0.000000e+00> : vector<40x128xf32>
    %2 = tpu.matmul %0, %1, %cst {dimension_numbers = #tpu.dot_dimension_numbers<[1], [0], [0], [1], [0, 0, 1, 1], [], []>} : vector<40x32xf32>, vector<32x128xf32>, vector<40x128xf32> -> vector<40x128xf32>
    %3 = vector.extract_strided_slice %2 {offsets = [0, 0], sizes = [40, 16], strides = [1, 1]} : vector<40x128xf32> to vector<40x16xf32>
    %c0_3 = arith.constant 0 : index
    %c0_4 = arith.constant 0 : index
    %4 = vector.load %arg4[%c0_3, %c0_4] : memref<1x16xf32, #tpu.memory_space<vmem>>, vector<1x16xf32>
    %5 = vector.broadcast %4 : vector<1x16xf32> to vector<40x16xf32>
    %6 = arith.addf %3, %5 : vector<40x16xf32>
    %c0_5 = arith.constant 0 : index
    %c0_6 = arith.constant 0 : index
    %7 = vector.load %arg5[%c0_5, %c0_6] : memref<40x16xf32, #tpu.memory_space<vmem>>, vector<40x16xf32>
    tpu.vector_store %arg5[%c0_5, %c0_6], %6 {strides = array<i32>} : memref<40x16xf32, #tpu.memory_space<vmem>>, vector<40x16xf32>,
    return
  }
  func.func @transform_0(%arg0: i32, %arg1: i32) -> (i32, i32) {
    %c0_i32 = arith.constant 0 : i32
    %c0_i32_0 = arith.constant 0 : i32
    return %arg0, %c0_i32 : i32, i32
  }
  func.func @transform_1(%arg0: i32, %arg1: i32) -> (i32, i32) {
    %c0_i32 = arith.constant 0 : i32
    %c0_i32_0 = arith.constant 0 : i32
    return %c0_i32, %arg1 : i32, i32
  }
  func.func @transform_2(%arg0: i32, %arg1: i32) -> (i32, i32) {
    %c0_i32 = arith.constant 0 : i32
    %c0_i32_0 = arith.constant 0 : i32
    return %c0_i32, %arg1 : i32, i32
  }
  func.func @transform_3(%arg0: i32, %arg1: i32) -> (i32, i32) {
    %c0_i32 = arith.constant 0 : i32
    return %arg0, %arg1 : i32, i32
  }
}

</mosaic_0001>

<llo_original>
// kernel: tpu_custom_call.1
$region0: #{tpu_custom_call.1}
  #allocation0 [shape = 'u32[]', space=smem, size = 0x4, offset = 0x4, fixed_abs, tag = 'smem constant byte address 0x4 - core index']
  #allocation1 [shape = 'u32[144,128]{1,0:T(1,128)}', space=vmem, size = 0x12000, scoped, tag = 'internal scratch']
  %s0 = inlined_call_operand.vmem [shape: f32[40,32], index: 0, kind: input, shape index: {}]
  %s1 = inlined_call_operand.vmem [shape: f32[32,128], index: 1, kind: input, shape index: {}]
  %s2 = inlined_call_operand.vmem [shape: f32[1,16], index: 2, kind: input, shape index: {}]
  %s3 = inlined_call_operand.vmem [shape: f32[40,16], index: 3, kind: output, shape index: {}]
  %s4 = sld [smem:[#allocation0]]
  $region22: #{tpu_custom_call.1} parent=0
    _
  %s6 = ssub.s32 1, %s4
  %s7 = scalar_select 0, %s6, %s4
  // Predicated region
  $region2: #{tpu_custom_call.1} parent=0 // pred_check
    _
  $region3: #{tpu_custom_call.1} parent=0 // pred_check_branch
    %9 = sbr.rel (0) target = $region5
  $region4: #{tpu_custom_call.1} parent=0 // pred_region
    _
  $region5: #{tpu_custom_call.1} parent=0 // pred_fallthru
    _
  // Predicated region
  $region6: #{tpu_custom_call.1} parent=0 // pred_check
    _
  $region7: #{tpu_custom_call.1} parent=0 // pred_check_branch
    %11 = sbr.rel (0) target = $region9
  $region8: #{tpu_custom_call.1} parent=0 // pred_region
    _
  $region9: #{tpu_custom_call.1} parent=0 // pred_fallthru
    _
  // Predicated region
  $region10: #{tpu_custom_call.1} parent=0 // pred_check
    _
  $region11: #{tpu_custom_call.1} parent=0 // pred_check_branch
    %13 = sbr.rel (0) target = $region13
  $region12: #{tpu_custom_call.1} parent=0 // pred_region
    _
  $region13: #{tpu_custom_call.1} parent=0 // pred_fallthru
    _
  %v14 = vld [vmem:[%s0] sm:$0xff]
  %v15 = vld [vmem:[%s0 + $0x8] sm:$0xff]
  %v16 = vld [vmem:[%s0 + $0x10] sm:$0xff]
  %v17 = vld [vmem:[%s0 + $0x18] sm:$0xff]
  %v18 = vld [vmem:[%s0 + $0x20] sm:$0xff]
  %v19 = vld [vmem:[%s1] sm:$0xff]
  %v20 = vld [vmem:[%s1 + $0x8] sm:$0xff]
  %v21 = vld [vmem:[%s1 + $0x10] sm:$0xff]
  %v22 = vld [vmem:[%s1 + $0x18] sm:$0xff]
  %vm23 = vcmask 261120
  %v25 = vsel %vm23, %v14, 0
  %v28 = vsel %vm23, %v15, 0
  %v31 = vsel %vm23, %v16, 0
  %v34 = vsel %vm23, %v17, 0
  %v37 = vsel %vm23, %v18, 0
  %39 = vmatprep.subr.mxu0 0.0
  %40 = vmatpush1.msra.mxu0 %v19
  %41 = vmatprep.subr.mxu0 0.0
  %42 = vmatpush1.msra.mxu0 %v20
  %43 = vmatprep.subr.mxu0 0.0
  %44 = vmatpush1.msra.mxu0 %v21
  %45 = vmatprep.subr.mxu0 0.0
  %46 = vmatpush1.msra.mxu0 %v22
  %47 = vmatprep.subr.mxu0 0.0
  %48 = vmatpush1.msra.mxu0 0.0
  %49 = vmatprep.subr.mxu0 0.0
  %50 = vmatpush1.msra.mxu0 0.0
  %51 = vmatprep.subr.mxu0 0.0
  %52 = vmatpush1.msra.mxu0 0.0
  %53 = vmatprep.subr.mxu0 0.0
  %54 = vmatpush1.msra.mxu0 0.0
  %55 = vmatprep.subr.mxu0 0.0
  %56 = vmatpush1.msra.mxu0 0.0
  %57 = vmatprep.subr.mxu0 0.0
  %58 = vmatpush1.msra.mxu0 0.0
  %59 = vmatprep.subr.mxu0 0.0
  %60 = vmatpush1.msra.mxu0 0.0
  %61 = vmatprep.subr.mxu0 0.0
  %62 = vmatpush1.msra.mxu0 0.0
  %63 = vmatprep.subr.mxu0 0.0
  %64 = vmatpush1.msra.mxu0 0.0
  %65 = vmatprep.subr.mxu0 0.0
  %66 = vmatpush1.msra.mxu0 0.0
  %67 = vmatprep.subr.mxu0 0.0
  %68 = vmatpush1.msra.mxu0 0.0
  %69 = vmatprep.subr.mxu0 0.0
  %70 = vmatpush1.msra.mxu0 0.0
  %71 = vmatprep.subr.mxu0 0.0
  %72 = vmatpush1.msra.mxu0 0.0
  %73 = vmatprep.subr.mxu0 0.0
  %74 = vmatpush1.msra.mxu0 0.0
  %75 = vmatprep.subr.mxu0 0.0
  %76 = vmatpush1.msra.mxu0 0.0
  %77 = vmatprep.subr.mxu0 0.0
  %78 = vmatpush1.msra.mxu0 0.0
  %79 = vmatprep.subr.mxu0 0.0
  %80 = vmatpush1.msra.mxu0 0.0
  %81 = vmatprep.subr.mxu0 0.0
  %82 = vmatpush1.msra.mxu0 0.0
  %83 = vmatprep.subr.mxu0 0.0
  %84 = vmatpush1.msra.mxu0 0.0
  %85 = vmatprep.subr.mxu0 0.0
  %86 = vmatpush1.msra.mxu0 0.0
  %87 = vmatprep.subr.mxu0 0.0
  %88 = vmatpush1.msra.mxu0 0.0
  %89 = vmatprep.subr.mxu0 0.0
  %90 = vmatpush1.msra.mxu0 0.0
  %91 = vmatprep.subr.mxu0 0.0
  %92 = vmatpush1.msra.mxu0 0.0
  %93 = vmatprep.subr.mxu0 0.0
  %94 = vmatpush1.msra.mxu0 0.0
  %95 = vmatprep.subr.mxu0 0.0
  %96 = vmatpush1.msra.mxu0 0.0
  %97 = vmatprep.subr.mxu0 0.0
  %98 = vmatpush1.msra.mxu0 0.0
  %99 = vmatprep.subr.mxu0 0.0
  %100 = vmatpush1.msra.mxu0 0.0
  %101 = vmatprep.subr.mxu0 0.0
  %102 = vmatpush1.msra.mxu0 0.0
  %103 = vmatprep.mubr.f32.mxu0 0.0
  %104 = vmatmul.mubr.f32.gmra.mrb[0].mxu0 %v25
  %v105 = vpop.f32.mrb[0].mxu0
  %v106 = vadd.f32 0.0, %v105
  %v107 = vpop.f32.mrb[0].mxu0
  %108 = vmatprep.mubr.f32.mxu0 0.0
  %109 = vmatmul.mubr.f32.gmra.mrb[0].mxu0 %v28
  %v110 = vpop.f32.mrb[0].mxu0
  %v111 = vadd.f32 0.0, %v110
  %v112 = vpop.f32.mrb[0].mxu0
  %113 = vmatprep.mubr.f32.mxu0 0.0
  %114 = vmatmul.mubr.f32.gmra.mrb[0].mxu0 %v31
  %v115 = vpop.f32.mrb[0].mxu0
  %v116 = vadd.f32 0.0, %v115
  %v117 = vpop.f32.mrb[0].mxu0
  %118 = vmatprep.mubr.f32.mxu0 0.0
  %119 = vmatmul.mubr.f32.gmra.mrb[0].mxu0 %v34
  %v120 = vpop.f32.mrb[0].mxu0
  %v121 = vadd.f32 0.0, %v120
  %v122 = vpop.f32.mrb[0].mxu0
  %123 = vmatprep.mubr.f32.mxu0 0.0
  %124 = vmatmul.mubr.f32.gmra.mrb[0].mxu0 %v37
  %v125 = vpop.f32.mrb[0].mxu0
  %v126 = vadd.f32 0.0, %v125
  %v127 = vpop.f32.mrb[0].mxu0
  %128 = vdwg.mxu0
  %v129 = vld [vmem:[%s2] sm:$0x1]
  %v131 = vlaneseq
  %v132 = vshrl.u32 %v131, 7
  %v133 = vsub.s32 0, %v132
  %v134 = vrot.slane %v129, %v133
  %v136 = vadd.f32 %v106, %v134
  %v137 = vadd.f32 %v111, %v134
  %v138 = vadd.f32 %v116, %v134
  %v139 = vadd.f32 %v121, %v134
  %v140 = vadd.f32 %v126, %v134
  %vm141 = vcmask 130048
  %142 = vst.msk [vmem:[%s3] sm:$0xff] %vm141, %v136
  %143 = vst.msk [vmem:[%s3 + $0x8] sm:$0xff] %vm141, %v137
  %144 = vst.msk [vmem:[%s3 + $0x10] sm:$0xff] %vm141, %v138
  %145 = vst.msk [vmem:[%s3 + $0x18] sm:$0xff] %vm141, %v139
  %146 = vst.msk [vmem:[%s3 + $0x20] sm:$0xff] %vm141, %v140
  // Predicated region
  $region14: #{tpu_custom_call.1} parent=0 // pred_check
    _
  $region15: #{tpu_custom_call.1} parent=0 // pred_check_branch
    %148 = sbr.rel (0) target = $region17
  $region16: #{tpu_custom_call.1} parent=0 // pred_region
    _
  $region17: #{tpu_custom_call.1} parent=0 // pred_fallthru
    _
  // Predicated region
  $region18: #{tpu_custom_call.1} parent=0 // pred_check
    _
  $region19: #{tpu_custom_call.1} parent=0 // pred_check_branch
    %150 = sbr.rel (0) target = $region21
  $region20: #{tpu_custom_call.1} parent=0 // pred_region
    _
  $region21: #{tpu_custom_call.1} parent=0 // pred_fallthru
    _

</llo_original>
